<compile_context>
chip_gen: v7x
topology: tpu7x:2x2x1
jax: 0.10.0
libtpu: 0.0.40
codegen_flags: <defaults>
</compile_context>

<pallas_src>
import math
import numpy as np
import jax
import jax.numpy as jnp
from jax.experimental import pallas as pl
from jax.experimental.pallas import tpu as pltpu


# ----------------------------------------------------------------------------
# Host-side calibration (mirrors BERTActQuantizer.init_quantization_scale)
# ----------------------------------------------------------------------------
def calibrate(x_np: np.ndarray, n_bits: int, max_iters: int):
    n_levels = 2 ** n_bits
    x_clone = np.array(x_np, dtype=np.float32, copy=True)
    means, deltas, zero_points = [], [], []
    for _ in range(max_iters):
        non_zero = x_clone[x_clone != 0]
        if non_zero.size == 0:
            break
        mean_val = float(np.abs(non_zero).mean())
        means.append(mean_val)
        outliers = np.abs(x_clone) > mean_val
        inliers = x_clone[~outliers]
        if inliers.size >= x_clone.size:
            break
        x_min = float(inliers.min())
        x_max = float(inliers.max())
        delta = (x_max - x_min) / (n_levels - 1)
        if delta == 0.0:
            # Guard: never bake a divide-by-zero / inf scale into the kernel
            # constants (torch behavior is undefined here anyway).
            break
        zero_points.append(float(np.round(-x_min / delta)))
        deltas.append(float(delta))
        x_clone[~outliers] = 0.0
    return means, deltas, zero_points


# ----------------------------------------------------------------------------
# Pallas kernel: per-element grouped fake quantization (fused selects)
# ----------------------------------------------------------------------------
def make_quant_kernel(means, deltas, zero_points, n_levels,
                      use_approx_recip=False):
    """means/deltas/zero_points are small Python-float lists -> compile-time
    constants baked into the kernel, exactly like the lists on the module.

    use_approx_recip=True drops the inv_delta select per band and derives
    1/delta per element with pl.reciprocal(approx=True) on the (otherwise idle)
    EUP slot — a ~25% VALU cut once there are many bands, at the cost of rare
    round-tie flips vs. the exact baked reciprocals. Default is exact.
    """
    n_groups = len(deltas)
    n_bands = len(means)
    inv_deltas = [1.0 / d for d in deltas]
    los = [-z for z in zero_points]           # lower clip bound = -zero_point
    span = float(n_levels - 1)

    def band_consts(b):
        # torch: group_indices = clamp(band, 0, len(deltas) - 1)
        g = min(b, n_groups - 1)
        return (jnp.float32(inv_deltas[g]),
                jnp.float32(deltas[g]),
                jnp.float32(los[g]))

    def kernel(x_ref, o_ref):
        x = x_ref[...].astype(jnp.float32)
        x_abs = jnp.abs(x)

        inv_d0, d0, lo0 = band_consts(0)
        inv_d, d, lo = inv_d0, d0, lo0
        # means[] is strictly increasing, so chaining lower-bound compares
        # selects exactly the band i with means[i-1] < |x| <= means[i].
        for i in range(1, n_bands):
            inv_di, di, loi = band_consts(i)
            m = x_abs > jnp.float32(means[i - 1])
            if not use_approx_recip:
                inv_d = jnp.where(m, inv_di, inv_d)
            d = jnp.where(m, di, d)
            lo = jnp.where(m, loi, lo)
        if n_bands > 1:
            # |x| above the top band keeps group 0 in the torch reference
            # (its group_indices entry never gets incremented).
            m_over = x_abs > jnp.float32(means[-1])
            if not use_approx_recip:
                inv_d = jnp.where(m_over, inv_d0, inv_d)
            d = jnp.where(m_over, d0, d)
            lo = jnp.where(m_over, lo0, lo)

        if use_approx_recip:
            inv_d = pl.reciprocal(d, approx=True)   # EUP slot, frees VALU work

        # (clip(round(x/d) + zp, 0, L-1) - zp) * d
        #   == clip(round(x * inv_d), -zp, (L-1) - zp) * d
        q = jnp.round(x * inv_d)
        q = jnp.clip(q, lo, lo + jnp.float32(span))
        o_ref[...] = (q * d).astype(o_ref.dtype)

    return kernel


# ----------------------------------------------------------------------------
# Wrapper: lane-dense reshape + byte-sized tiles + >=2 grid programs
# ----------------------------------------------------------------------------
def _pick_lane_width(n, max_lane=1024):
    """n is a multiple of 128; largest multiple of 128 <= max_lane dividing n."""
    c = min(max_lane, n)
    c -= c % 128
    while c > 128 and n % c != 0:
        c -= 128
    return max(c, 128)


def _choose_block_rows(R, C, target_f32_tile_bytes):
    """Byte-based row blocking: ~target_f32_tile_bytes of f32 working set per
    tile, rounded down to a multiple of 8 rows; and, whenever there is enough
    work (R >= 16), capped so the grid has >= 2 programs so the "parallel" axis
    can shard across v7x's two TensorCores."""
    rows = max(8, (target_f32_tile_bytes // (C * 4)) // 8 * 8)
    if R >= 16:
        rows = min(rows, max(8, (R // 2) // 8 * 8))
        return int(rows)
    # Tiny input: single full-height block (block_shape == array dims is legal
    # even when not a multiple of 8).
    return int(R)


def bert_act_quantize(x, means, deltas, zero_points, n_levels,
                      max_lane=1024, target_f32_tile_bytes=1 << 20,
                      use_approx_recip=False):
    """x: any-shape activation tensor -> same-shape fake-quantized tensor."""
    orig_shape = x.shape
    n = math.prod(orig_shape)
    if len(deltas) == 0 or n == 0:
        # Mirrors torch.clamp(group, 0, -1) edge case: nothing is dequantized.
        return jnp.zeros_like(x)

    itemsize = np.dtype(x.dtype).itemsize
    flat = x.reshape(-1)
    if n % 128 == 0:
        # Fast path: element count already lane-aligned (true for every
        # standard BERT activation shape, e.g. hidden 768/1024/3072/4096).
        # Pure free reshape — no pad/slice HBM round trips.
        n_pad = n
    else:
        # TODO(synk): ragged tails could be handled with a masked store on the
        # last grid block instead of a full-tensor pad + post-slice.
        pad = 128 - (n % 128)
        flat = jnp.pad(flat, (0, pad))
        n_pad = n + pad

    C = _pick_lane_width(n_pad, max_lane)
    R = n_pad // C
    x2d = flat.reshape(R, C)

    block_rows = _choose_block_rows(R, C, target_f32_tile_bytes)
    grid = (pl.cdiv(R, block_rows),)            # ragged last block handled by Pallas

    tile_in = block_rows * C * itemsize
    tile_f32 = block_rows * C * 4
    # Derived VMEM budget (no floor/cap): double-buffered in + out tiles,
    # ~a dozen f32 tiles' worth of elementwise temporaries, plus fixed headroom.
    # With ~1 MiB tiles this lands well under v7x's 64 MiB physical VMEM.
    vmem_limit = int(2 * tile_in + 2 * tile_in + 12 * tile_f32 + (4 << 20))

    kernel = make_quant_kernel(means, deltas, zero_points, n_levels,
                               use_approx_recip=use_approx_recip)
    out2d = pl.pallas_call(
        kernel,
        out_shape=jax.ShapeDtypeStruct((R, C), x.dtype),
        grid=grid,
        in_specs=[pl.BlockSpec((block_rows, C), lambda i: (i, 0))],
        out_specs=pl.BlockSpec((block_rows, C), lambda i: (i, 0)),
        compiler_params=pltpu.CompilerParams(
            dimension_semantics=("parallel",),
            vmem_limit_bytes=vmem_limit),
    )(x2d)

    out_flat = out2d.reshape(-1)
    if n_pad != n:
        out_flat = out_flat[:n]
    return out_flat.reshape(orig_shape)


# ----------------------------------------------------------------------------
# NumPy reference (mirrors BERTActQuantizer.forward structure, f32 math).
# Only deviation from the literal torch code: round(x * (1/delta)) instead of
# round(x / delta) — algebraically identical, bit-exact except at exact
# round-to-nearest ties, and it matches the kernel's reciprocal multiply.
# ----------------------------------------------------------------------------
def reference_forward(x_np, means, deltas, zero_points, n_levels):
    x = x_np.astype(np.float32)
    x_abs = np.abs(x)
    group_indices = np.zeros(x.shape, dtype=np.int64)
    for i, mean in enumerate(means):
        if i == 0:
            group_indices += (x_abs <= np.float32(mean)).astype(np.int64) * i
        else:
            prev_mean = np.float32(means[i - 1])
            group_indices += (((x_abs > prev_mean) & (x_abs <= np.float32(mean)))
                              .astype(np.int64) * i)
    group_indices = np.clip(group_indices, 0, len(deltas) - 1)
    x_dequant = np.zeros_like(x)
    for group in range(len(means)):
        if group >= len(deltas):
            continue
        mask = group_indices == group
        if not mask.any():
            continue
        delta = np.float32(deltas[group])
        inv_delta = np.float32(1.0 / deltas[group])
        zp = np.float32(zero_points[group])
        x_int = np.round(x[mask] * inv_delta) + zp
        x_quant = np.clip(x_int, np.float32(0), np.float32(n_levels - 1))
        x_dequant[mask] = (x_quant - zp) * delta
    return x_dequant


if __name__ == "__main__":
    n_bits = 8
    max_iters = 10
    n_levels = 2 ** n_bits
    key = jax.random.PRNGKey(0)

    # --- Case 1: BERT-like activation (batch=2, seq=8, hidden=32); n % 128 == 0
    #             so it exercises the no-pad lane-dense fast path.
    x = jax.random.normal(key, (2, 8, 32), dtype=jnp.float32)
    x_np = np.asarray(x)
    # One-time calibration (== first forward's init_quantization_scale).
    # TODO(synk): channel_wise=True raises NotImplementedError in the original
    # module, so it is intentionally not implemented here either.
    means, deltas, zero_points = calibrate(x_np, n_bits, max_iters)
    out = bert_act_quantize(x, means, deltas, zero_points, n_levels)
    out = jax.block_until_ready(out)
    ref = reference_forward(x_np, means, deltas, zero_points, n_levels)
    np.testing.assert_allclose(np.asarray(out), ref, rtol=1e-5, atol=1e-5)

    # --- Case 2: ragged element count (3*7*5 = 105) to exercise the pad path.
    key2 = jax.random.split(key)[0]
    y = jax.random.normal(key2, (3, 7, 5), dtype=jnp.float32)
    y_np = np.asarray(y)
    means2, deltas2, zps2 = calibrate(y_np, n_bits, max_iters)
    out2 = bert_act_quantize(y, means2, deltas2, zps2, n_levels)
    out2 = jax.block_until_ready(out2)
    ref2 = reference_forward(y_np, means2, deltas2, zps2, n_levels)
    np.testing.assert_allclose(np.asarray(out2), ref2, rtol=1e-5, atol=1e-5)

    print("KERNEL_OK")
</pallas_src>

<mosaic_0001>
module attributes {stable_mosaic.version = 11 : i64} {
  func.func @kernel(%arg0: i32, %arg1: memref<1x512xf32, #tpu.memory_space<vmem>>, %arg2: memref<1x512xf32, #tpu.memory_space<vmem>>) attributes {dimension_semantics = [#tpu.dimension_semantics<parallel>], iteration_bounds = array<i64: 1>, scalar_prefetch = 0 : i64, scratch_operands = 0 : i64, tpu.core_type = #tpu.core_type<tc>, window_params = [{transform_indices = @transform_0, window_bounds = array<i64: 1, 512>}, {transform_indices = @transform_1, window_bounds = array<i64: 1, 512>}]} {
    %c0 = arith.constant 0 : index
    %c0_0 = arith.constant 0 : index
    %0 = vector.load %arg1[%c0, %c0_0] : memref<1x512xf32, #tpu.memory_space<vmem>>, vector<1x512xf32>
    %1 = math.absf %0 : vector<1x512xf32>
    %cst = arith.constant 0.777949929 : f32
    %2 = vector.broadcast %cst : f32 to vector<1x512xf32>
    %3 = arith.cmpf ogt, %1, %2 : vector<1x512xf32>
    %cst_1 = arith.constant 98.6655502 : f32
    %cst_2 = arith.constant 165.936188 : f32
    %4 = vector.broadcast %cst_1 : f32 to vector<1x512xf32>
    %5 = vector.broadcast %cst_2 : f32 to vector<1x512xf32>
    %6 = arith.select %3, %4, %5 : vector<1x512xi1>, vector<1x512xf32>
    %cst_3 = arith.constant 0.0101352502 : f32
    %cst_4 = arith.constant 0.00602641329 : f32
    %7 = vector.broadcast %cst_3 : f32 to vector<1x512xf32>
    %8 = vector.broadcast %cst_4 : f32 to vector<1x512xf32>
    %9 = arith.select %3, %7, %8 : vector<1x512xi1>, vector<1x512xf32>
    %cst_5 = arith.constant -1.250000e+02 : f32
    %cst_6 = arith.constant -1.280000e+02 : f32
    %10 = vector.broadcast %cst_5 : f32 to vector<1x512xf32>
    %11 = vector.broadcast %cst_6 : f32 to vector<1x512xf32>
    %12 = arith.select %3, %10, %11 : vector<1x512xi1>, vector<1x512xf32>
    %cst_7 = arith.constant 1.31912696 : f32
    %13 = vector.broadcast %cst_7 : f32 to vector<1x512xf32>
    %14 = arith.cmpf ogt, %1, %13 : vector<1x512xf32>
    %cst_8 = arith.constant 73.5443954 : f32
    %15 = vector.broadcast %cst_8 : f32 to vector<1x512xf32>
    %16 = arith.select %14, %15, %6 : vector<1x512xi1>, vector<1x512xf32>
    %cst_9 = arith.constant 0.0135972295 : f32
    %17 = vector.broadcast %cst_9 : f32 to vector<1x512xf32>
    %18 = arith.select %14, %17, %9 : vector<1x512xi1>, vector<1x512xf32>
    %cst_10 = arith.constant -1.270000e+02 : f32
    %19 = vector.broadcast %cst_10 : f32 to vector<1x512xf32>
    %20 = arith.select %14, %19, %12 : vector<1x512xi1>, vector<1x512xf32>
    %cst_11 = arith.constant 1.79563797 : f32
    %21 = vector.broadcast %cst_11 : f32 to vector<1x512xf32>
    %22 = arith.cmpf ogt, %1, %21 : vector<1x512xf32>
    %cst_12 = arith.constant 60.6267471 : f32
    %23 = vector.broadcast %cst_12 : f32 to vector<1x512xf32>
    %24 = arith.select %22, %23, %16 : vector<1x512xi1>, vector<1x512xf32>
    %cst_13 = arith.constant 0.016494371 : f32
    %25 = vector.broadcast %cst_13 : f32 to vector<1x512xf32>
    %26 = arith.select %22, %25, %18 : vector<1x512xi1>, vector<1x512xf32>
    %cst_14 = arith.constant -1.280000e+02 : f32
    %27 = vector.broadcast %cst_14 : f32 to vector<1x512xf32>
    %28 = arith.select %22, %27, %20 : vector<1x512xi1>, vector<1x512xf32>
    %cst_15 = arith.constant 2.17906237 : f32
    %29 = vector.broadcast %cst_15 : f32 to vector<1x512xf32>
    %30 = arith.cmpf ogt, %1, %29 : vector<1x512xf32>
    %cst_16 = arith.constant 53.0853157 : f32
    %31 = vector.broadcast %cst_16 : f32 to vector<1x512xf32>
    %32 = arith.select %30, %31, %24 : vector<1x512xi1>, vector<1x512xf32>
    %cst_17 = arith.constant 0.0188376009 : f32
    %33 = vector.broadcast %cst_17 : f32 to vector<1x512xf32>
    %34 = arith.select %30, %33, %26 : vector<1x512xi1>, vector<1x512xf32>
    %cst_18 = arith.constant -1.300000e+02 : f32
    %35 = vector.broadcast %cst_18 : f32 to vector<1x512xf32>
    %36 = arith.select %30, %35, %28 : vector<1x512xi1>, vector<1x512xf32>
    %cst_19 = arith.constant 2.52918935 : f32
    %37 = vector.broadcast %cst_19 : f32 to vector<1x512xf32>
    %38 = arith.cmpf ogt, %1, %37 : vector<1x512xf32>
    %cst_20 = arith.constant 48.9815254 : f32
    %39 = vector.broadcast %cst_20 : f32 to vector<1x512xf32>
    %40 = arith.select %38, %39, %32 : vector<1x512xi1>, vector<1x512xf32>
    %cst_21 = arith.constant 0.0204158612 : f32
    %41 = vector.broadcast %cst_21 : f32 to vector<1x512xf32>
    %42 = arith.select %38, %41, %34 : vector<1x512xi1>, vector<1x512xf32>
    %cst_22 = arith.constant -1.260000e+02 : f32
    %43 = vector.broadcast %cst_22 : f32 to vector<1x512xf32>
    %44 = arith.select %38, %43, %36 : vector<1x512xi1>, vector<1x512xf32>
    %cst_23 = arith.constant 2.80482793 : f32
    %45 = vector.broadcast %cst_23 : f32 to vector<1x512xf32>
    %46 = arith.cmpf ogt, %1, %45 : vector<1x512xf32>
    %cst_24 = arith.constant 79.7174759 : f32
    %47 = vector.broadcast %cst_24 : f32 to vector<1x512xf32>
    %48 = arith.select %46, %47, %40 : vector<1x512xi1>, vector<1x512xf32>
    %cst_25 = arith.constant 0.0125443013 : f32
    %49 = vector.broadcast %cst_25 : f32 to vector<1x512xf32>
    %50 = arith.select %46, %49, %42 : vector<1x512xi1>, vector<1x512xf32>
    %cst_26 = arith.constant -2.550000e+02 : f32
    %51 = vector.broadcast %cst_26 : f32 to vector<1x512xf32>
    %52 = arith.select %46, %51, %44 : vector<1x512xi1>, vector<1x512xf32>
    %cst_27 = arith.constant 3.24709702 : f32
    %53 = vector.broadcast %cst_27 : f32 to vector<1x512xf32>
    %54 = arith.cmpf ogt, %1, %53 : vector<1x512xf32>
    %cst_28 = arith.constant 79.7174759 : f32
    %55 = vector.broadcast %cst_28 : f32 to vector<1x512xf32>
    %56 = arith.select %54, %55, %48 : vector<1x512xi1>, vector<1x512xf32>
    %cst_29 = arith.constant 0.0125443013 : f32
    %57 = vector.broadcast %cst_29 : f32 to vector<1x512xf32>
    %58 = arith.select %54, %57, %50 : vector<1x512xi1>, vector<1x512xf32>
    %cst_30 = arith.constant -2.550000e+02 : f32
    %59 = vector.broadcast %cst_30 : f32 to vector<1x512xf32>
    %60 = arith.select %54, %59, %52 : vector<1x512xi1>, vector<1x512xf32>
    %cst_31 = arith.constant 3.29539704 : f32
    %61 = vector.broadcast %cst_31 : f32 to vector<1x512xf32>
    %62 = arith.cmpf ogt, %1, %61 : vector<1x512xf32>
    %cst_32 = arith.constant 165.936188 : f32
    %63 = vector.broadcast %cst_32 : f32 to vector<1x512xf32>
    %64 = arith.select %62, %63, %56 : vector<1x512xi1>, vector<1x512xf32>
    %cst_33 = arith.constant 0.00602641329 : f32
    %65 = vector.broadcast %cst_33 : f32 to vector<1x512xf32>
    %66 = arith.select %62, %65, %58 : vector<1x512xi1>, vector<1x512xf32>
    %cst_34 = arith.constant -1.280000e+02 : f32
    %67 = vector.broadcast %cst_34 : f32 to vector<1x512xf32>
    %68 = arith.select %62, %67, %60 : vector<1x512xi1>, vector<1x512xf32>
    %69 = arith.mulf %0, %64 : vector<1x512xf32>
    %70 = math.roundeven %69 : vector<1x512xf32>
    %cst_35 = arith.constant 2.550000e+02 : f32
    %71 = vector.broadcast %cst_35 : f32 to vector<1x512xf32>
    %72 = arith.addf %68, %71 : vector<1x512xf32>
    %73 = arith.maximumf %68, %70 : vector<1x512xf32>
    %74 = arith.minimumf %72, %73 : vector<1x512xf32>
    %75 = arith.mulf %74, %66 : vector<1x512xf32>
    %c0_36 = arith.constant 0 : index
    %c0_37 = arith.constant 0 : index
    %76 = vector.load %arg2[%c0_36, %c0_37] : memref<1x512xf32, #tpu.memory_space<vmem>>, vector<1x512xf32>
    tpu.vector_store %arg2[%c0_36, %c0_37], %75 {strides = array<i32>} : memref<1x512xf32, #tpu.memory_space<vmem>>, vector<1x512xf32>,
    return
  }
  func.func @transform_0(%arg0: i32) -> (i32, i32) {
    %c0_i32 = arith.constant 0 : i32
    %c0_i32_0 = arith.constant 0 : i32
    return %arg0, %c0_i32 : i32, i32
  }
  func.func @transform_1(%arg0: i32) -> (i32, i32) {
    %c0_i32 = arith.constant 0 : i32
    %c0_i32_0 = arith.constant 0 : i32
    return %arg0, %c0_i32 : i32, i32
  }
}

</mosaic_0001>

<llo_original>
// kernel: tpu_custom_call.1
$region0: #{tpu_custom_call.1}
  #allocation0 [shape = 'u32[]', space=smem, size = 0x4, offset = 0x4, fixed_abs, tag = 'smem constant byte address 0x4 - core index']
  #allocation1 [shape = 'u32[144,128]{1,0:T(1,128)}', space=vmem, size = 0x12000, scoped, tag = 'internal scratch']
  %s0 = inlined_call_operand.hbm [shape: f32[1,512], index: 0, kind: input, shape index: {}]
  %s1 = inlined_call_operand.hbm [shape: f32[1,512], index: 1, kind: output, shape index: {}]
  %s2 = sld [smem:[#allocation0]]
  $region18: #{tpu_custom_call.1} parent=0
    _
  %s4 = ssub.s32 1, %s2
  %s5 = scalar_select 0, %s4, %s2
  $region1: #{tpu_custom_call.1} parent=0
    #allocation2 [shape = 'u8[2048]{0}', space=vmem, size = 0x800, scoped, tag = 'input window, operand 0, single buffered']
    #allocation3 [shape = 's32[1]{0}', space=sflag, size = 0x4, scoped, tag = 'scoped memory for tpu_custom_call.1']
    #allocation4 [shape = 's32[1]{0}', space=sflag, size = 0x4, scoped, tag = 'scoped memory for tpu_custom_call.1']
    #allocation5 [shape = 'u8[2048]{0}', space=vmem, size = 0x800, scoped, tag = 'output window, operand 0, single buffered']
    %6 = vsyncpa [#allocation3], 0
    %7 = vsyncpa [#allocation4], 0
    // Predicated region
    $region2: #{tpu_custom_call.1} parent=1 // pred_check
      _
    $region3: #{tpu_custom_call.1} parent=1 // pred_check_branch
      %9 = sbr.rel (0) target = $region5
    $region4: #{tpu_custom_call.1} parent=1 // pred_region
      %s11 = ssub.s32 64, 64
      %12 = vsyncadd [#allocation3], %s11
      %s14 = sshll.u32 [#allocation2], 4
      %s15 = int_to_ptr.vmem [resolvable:$true] %s14
      %17 = dma.hbm_to_vmem [thread:$0]  %s0, 64, %s15, [#allocation3]
    $region5: #{tpu_custom_call.1} parent=1 // pred_fallthru
      _
    // Predicated region
    $region6: #{tpu_custom_call.1} parent=1 // pred_check
      _
    $region7: #{tpu_custom_call.1} parent=1 // pred_check_branch
      %19 = sbr.rel (0) target = $region9
    $region8: #{tpu_custom_call.1} parent=1 // pred_region
      %20 = dma.done [#allocation3], 64
    $region9: #{tpu_custom_call.1} parent=1 // pred_fallthru
      _
    %v21 = vld [vmem:[#allocation2] sm:$0xf]
    %v22 = vand.u32 2147483647, %v21
    %vm23 = vcmp.gt.f32.partialorder %v22, 0.7779499
    %v24 = vsel %vm23, 98.66555, 165.93619
    %v25 = vsel %vm23, 0.01013525, 0.0060264133
    %v26 = vsel %vm23, -125.0, -128.0
    %vm27 = vcmp.gt.f32.partialorder %v22, 1.319127
    %v28 = vsel %vm27, 73.544395, %v24
    %v29 = vsel %vm27, 0.0135972295, %v25
    %v30 = vsel %vm27, -127.0, %v26
    %vm31 = vcmp.gt.f32.partialorder %v22, 1.795638
    %v32 = vsel %vm31, 60.626747, %v28
    %v33 = vsel %vm31, 0.016494371, %v29
    %v34 = vsel %vm31, -128.0, %v30
    %vm35 = vcmp.gt.f32.partialorder %v22, 2.1790624
    %v36 = vsel %vm35, 53.085316, %v32
    %v37 = vsel %vm35, 0.018837601, %v33
    %v38 = vsel %vm35, -130.0, %v34
    %vm39 = vcmp.gt.f32.partialorder %v22, 2.5291893
    %v40 = vsel %vm39, 48.981525, %v36
    %v41 = vsel %vm39, 0.020415861, %v37
    %v42 = vsel %vm39, -126.0, %v38
    %vm43 = vcmp.gt.f32.partialorder %v22, 2.804828
    %v44 = vsel %vm43, 79.717476, %v40
    %v45 = vsel %vm43, 0.012544301, %v41
    %v46 = vsel %vm43, -255.0, %v42
    %vm47 = vcmp.gt.f32.partialorder %v22, 3.247097
    %v48 = vsel %vm47, 79.717476, %v44
    %v49 = vsel %vm47, 0.012544301, %v45
    %v50 = vsel %vm47, -255.0, %v46
    %vm51 = vcmp.gt.f32.partialorder %v22, 3.295397
    %v52 = vsel %vm51, 165.93619, %v48
    %v53 = vsel %vm51, 0.0060264133, %v49
    %v54 = vsel %vm51, -128.0, %v50
    %v55 = vmul.f32 %v21, %v52
    %v56 = vround.ne.pseudo %v55
    %v57 = vadd.f32 %v54, 255.0
    %v58 = vmax.f32 %v54, %v56
    %v59 = vmin.f32 %v57, %v58
    %v60 = vmul.f32 %v59, %v53
    %v61 = vlaneseq
    %vm62 = vcmp.ge.s32.totalorder %v61, 0
    %vm63 = vcmp.lt.s32.totalorder %v61, 512
    %vm64 = vmand %vm62, %vm63
    %65 = vst.msk [vmem:[#allocation5] sm:$0xf] %vm64, %v60
    // Predicated region
    $region10: #{tpu_custom_call.1} parent=1 // pred_check
      _
    $region11: #{tpu_custom_call.1} parent=1 // pred_check_branch
      %67 = sbr.rel (0) target = $region13
    $region12: #{tpu_custom_call.1} parent=1 // pred_region
      %s69 = ssub.s32 64, 64
      %70 = vsyncadd [#allocation4], %s69
      %s72 = sshll.u32 [#allocation5], 4
      %s73 = int_to_ptr.vmem [resolvable:$true] %s72
      %75 = dma.vmem_to_hbm [thread:$0]  %s73, 64, %s1, [#allocation4]
    $region13: #{tpu_custom_call.1} parent=1 // pred_fallthru
      _
    // Predicated region
    $region14: #{tpu_custom_call.1} parent=1 // pred_check
      _
    $region15: #{tpu_custom_call.1} parent=1 // pred_check_branch
      %77 = sbr.rel (0) target = $region17
    $region16: #{tpu_custom_call.1} parent=1 // pred_region
      %78 = dma.done [#allocation4], 64
    $region17: #{tpu_custom_call.1} parent=1 // pred_fallthru
      _
    %79 = vsyncpa [#allocation3], 1
    %80 = vsyncpa [#allocation4], 1

</llo_original>
